<compile_context>
chip_gen: v5e
topology: v5e:2x2
jax: 0.10.0
libtpu: 0.0.40
codegen_flags: <defaults>
</compile_context>

<pallas_src>
import functools

import jax
import jax.numpy as jnp
from jax.experimental import pallas as pl
from jax.experimental.pallas import tpu as pltpu


_LANE = 128


def _cdiv(a, b):
    return -(-a // b)


def _round_up(n, m):
    return ((n + m - 1) // m) * m


def _sublane(dtype):
    # VMEM second-minor tiling: (8,128) f32, (16,128) bf16, (32,128) int8.
    return max(8, 32 // jnp.dtype(dtype).itemsize)


def _chip_budgets():
    """(per-block byte target, scoped VMEM limit) derived from chip VMEM capacity."""
    cap = 64 * 1024 * 1024          # conservative default (v7x per-core VMEM)
    try:
        info = pltpu.get_tpu_info()
        cap = int(getattr(info, "vmem_capacity_bytes", cap)) or cap
    except Exception:
        pass
    block_target = max(2 * 1024 * 1024, cap // 10)     # ~6.4 MiB v7x, ~12.8 MiB v5e/v6e
    vmem_limit = max(32 * 1024 * 1024, min(cap - (8 << 20), int(cap * 0.8)))
    return block_target, vmem_limit


def _num_tensorcores():
    try:
        kind = jax.devices()[0].device_kind.lower()
    except Exception:
        return 1
    return 2 if "v7" in kind else 1   # v7x: 2 TCs/chip; v5e/v6e: 1


# ---------------------------------------------------------------------------
# Fused single-pass kernel: one (Bt, C, HW) block per grid step.
# ---------------------------------------------------------------------------
def _fused_kernel(x_ref, w1_ref, b1_ref, w2_ref, b2_ref, o_ref, *, inv_hw):
    # f32-accumulating channel mean straight off the input block (no full-block
    # f32 temporary kept live across the MLP).
    mean = jnp.sum(x_ref[...], axis=-1, dtype=jnp.float32) * inv_hw       # (Bt, C)
    h = jnp.dot(mean, w1_ref[...], preferred_element_type=jnp.float32) + b1_ref[...]
    h = jnp.maximum(h, 0.0)                                               # ReLU
    gate = jax.nn.sigmoid(
        jnp.dot(h, w2_ref[...], preferred_element_type=jnp.float32) + b2_ref[...])
    # Re-read the resident block; multiply in the input's native dtype
    # (bf16-native on v6e/v7x; f32 input stays f32).
    o_ref[...] = x_ref[...] * gate[:, :, None].astype(o_ref.dtype)


# ---------------------------------------------------------------------------
# Two-phase path, phase 1: dense per-row spatial sums on the (B*C, HW) view.
# grid = (n_r, n_hw); spatial axis is the inner "arbitrary" reduction axis.
# ---------------------------------------------------------------------------
def _rowsum_kernel(x_ref, o_ref, *, hw, hwt, mask_tail):
    s = pl.program_id(1)

    @pl.when(s == 0)
    def _init():
        o_ref[...] = jnp.zeros_like(o_ref)

    x = x_ref[...]
    if mask_tail:
        # Tail spatial tile: zero out-of-range lanes so they don't bias the sum.
        col = jax.lax.broadcasted_iota(jnp.int32, x.shape, 1)
        x = jnp.where(col < (hw - s * hwt), x, jnp.zeros_like(x))
    o_ref[...] += jnp.sum(x, axis=-1, keepdims=True, dtype=jnp.float32)


# ---------------------------------------------------------------------------
# Two-phase path, phase 2: out = x * gate on the dense 2-D (B*C, HW) view.
# ---------------------------------------------------------------------------
def _apply_kernel(x_ref, g_ref, o_ref):
    o_ref[...] = x_ref[...] * g_ref[...].astype(o_ref.dtype)


def channel_attention(x_nchw, w1, b1, w2, b2, *, force_two_phase=False):
    """x_nchw: (B, C, H, W), any float dtype. w1: (C, Hd), b1: (Hd,), w2: (Hd, C), b2: (C,)."""
    B, C, H, W = x_nchw.shape
    HW = H * W
    Hd = w1.shape[1]
    dtype = x_nchw.dtype
    itemsize = jnp.dtype(dtype).itemsize
    sub = _sublane(dtype)
    inv_hw = 1.0 / float(HW)

    block_target, vmem_limit = _chip_budgets()

    w1f = w1.astype(jnp.float32)
    w2f = w2.astype(jnp.float32)
    b1f = b1.reshape(1, Hd).astype(jnp.float32)
    b2f = b2.reshape(1, C).astype(jnp.float32)

    x3 = x_nchw.reshape(B, C, HW)      # free metadata reshape; no pad, no copy

    # VMEM footprint of one image's (C, HW) slab after (sublane, lane) tiling.
    per_image_vmem = _round_up(C, sub) * _round_up(HW, _LANE) * itemsize
    use_fused = (not force_two_phase) and per_image_vmem <= block_target

    if use_fused:
        # -------- fused single-pass: read x once, write out once --------
        bt = max(1, min(B, block_target // per_image_vmem))
        n_b = _cdiv(B, bt)
        # On 2-TensorCore parts (v7x) make sure both cores get a grid step,
        # as long as each step still moves a reasonably large block.
        if _num_tensorcores() >= 2 and n_b < 2 and B >= 2:
            bt_half = _cdiv(B, 2)
            if bt_half * per_image_vmem >= (1 << 20):
                bt = bt_half
                n_b = _cdiv(B, bt)

        out3 = pl.pallas_call(
            functools.partial(_fused_kernel, inv_hw=inv_hw),
            out_shape=jax.ShapeDtypeStruct((B, C, HW), dtype),
            grid_spec=pltpu.PrefetchScalarGridSpec(
                num_scalar_prefetch=0,
                grid=(n_b,),
                in_specs=[
                    pl.BlockSpec((bt, C, HW), lambda b: (b, 0, 0)),   # x
                    pl.BlockSpec((C, Hd), lambda b: (0, 0)),          # W1 (in x out)
                    pl.BlockSpec((1, Hd), lambda b: (0, 0)),          # b1
                    pl.BlockSpec((Hd, C), lambda b: (0, 0)),          # W2 (in x out)
                    pl.BlockSpec((1, C), lambda b: (0, 0)),           # b2
                ],
                out_specs=pl.BlockSpec((bt, C, HW), lambda b: (b, 0, 0)),
            ),
            compiler_params=pltpu.CompilerParams(
                dimension_semantics=("parallel",),
                vmem_limit_bytes=vmem_limit,
            ),
        )(x3, w1f, b1f, w2f, b2f)
        return out3.reshape(B, C, H, W)

    # ------------- two-phase: dense row-sums -> JAX gate MLP -> tiled apply -------------
    R = B * C
    x2 = x3.reshape(R, HW)

    # Spatial tile: full extent when it fits the row budget; otherwise a
    # 128-multiple tile (ragged tail masked in-kernel for the reduction,
    # write-masked by the DMA for the apply).
    hwt_max = max(_LANE, (block_target // (sub * itemsize)) // _LANE * _LANE)
    if HW <= hwt_max:
        hwt, n_hw, mask_tail = HW, 1, False
    else:
        hwt = hwt_max
        n_hw = _cdiv(HW, hwt)
        mask_tail = (HW % hwt) != 0

    rt_max = max(sub, (block_target // (hwt * itemsize)) // sub * sub)
    rt = R if R <= rt_max else rt_max
    n_r = _cdiv(R, rt)

    # Phase 1: per-row f32 spatial sums (R, 1); tiny MLP hoisted out of the kernel.
    sums = pl.pallas_call(
        functools.partial(_rowsum_kernel, hw=HW, hwt=hwt, mask_tail=mask_tail),
        out_shape=jax.ShapeDtypeStruct((R, 1), jnp.float32),
        grid_spec=pltpu.PrefetchScalarGridSpec(
            num_scalar_prefetch=0,
            grid=(n_r, n_hw),
            in_specs=[pl.BlockSpec((rt, hwt), lambda r, s: (r, s))],
            out_specs=pl.BlockSpec((rt, 1), lambda r, s: (r, 0)),
        ),
        compiler_params=pltpu.CompilerParams(
            dimension_semantics=("parallel", "arbitrary"),
            vmem_limit_bytes=vmem_limit,
        ),
    )(x2)

    # Gate MLP in plain JAX (negligible FLOPs; keeps the streaming kernels
    # free of weight operands).
    mean = sums.reshape(B, C) * inv_hw
    h = jnp.maximum(mean @ w1f + b1f, 0.0)
    gate = jax.nn.sigmoid(h @ w2f + b2f)                       # (B, C) f32
    g2 = gate.reshape(R, 1)

    # Phase 2: out = x * gate on the dense 2-D view (gate broadcast over lanes).
    out2 = pl.pallas_call(
        _apply_kernel,
        out_shape=jax.ShapeDtypeStruct((R, HW), dtype),
        grid_spec=pltpu.PrefetchScalarGridSpec(
            num_scalar_prefetch=0,
            grid=(n_r, n_hw),
            in_specs=[
                pl.BlockSpec((rt, hwt), lambda r, s: (r, s)),
                pl.BlockSpec((rt, 1), lambda r, s: (r, 0)),
            ],
            out_specs=pl.BlockSpec((rt, hwt), lambda r, s: (r, s)),
        ),
        compiler_params=pltpu.CompilerParams(
            dimension_semantics=("parallel", "parallel"),
            vmem_limit_bytes=vmem_limit,
        ),
    )(x2, g2)

    return out2.reshape(B, C, H, W)


def _reference(x, w1, b1, w2, b2):
    mean = jnp.mean(x, axis=(2, 3))                            # (B, C)
    h = jnp.maximum(mean @ w1 + b1, 0.0)
    gate = jax.nn.sigmoid(h @ w2 + b2)                         # (B, C)
    return x * gate[:, :, None, None]


if __name__ == "__main__":
    B, C, H, W = 2, 4, 16, 16
    hidden = C  # hidden_size=-1 -> input_channels

    key = jax.random.PRNGKey(0)
    kx, kw1, kb1, kw2, kb2 = jax.random.split(key, 5)

    x = jax.random.normal(kx, (B, C, H, W), dtype=jnp.float32)

    # nn.Linear(input_channels, hidden): stored pre-transposed so y = x @ w + b.
    bound1 = 1.0 / jnp.sqrt(C)
    w1 = jax.random.uniform(kw1, (C, hidden), minval=-bound1, maxval=bound1, dtype=jnp.float32)
    b1 = jax.random.uniform(kb1, (hidden,), minval=-bound1, maxval=bound1, dtype=jnp.float32)
    bound2 = 1.0 / jnp.sqrt(hidden)
    w2 = jax.random.uniform(kw2, (hidden, C), minval=-bound2, maxval=bound2, dtype=jnp.float32)
    b2 = jax.random.uniform(kb2, (C,), minval=-bound2, maxval=bound2, dtype=jnp.float32)

    ref = _reference(x, w1, b1, w2, b2)

    # 1) fused single-pass path, f32 I/O.
    out = jax.block_until_ready(channel_attention(x, w1, b1, w2, b2))
    assert out.shape == (B, C, H, W) and out.dtype == x.dtype
    assert jnp.allclose(out, ref, atol=1e-5, rtol=1e-5), "fused path mismatch vs reference"

    # 2) two-phase (reduce -> gate, tiled apply) path, exercised explicitly at small shapes.
    out_tp = jax.block_until_ready(channel_attention(x, w1, b1, w2, b2, force_two_phase=True))
    assert jnp.allclose(out_tp, ref, atol=1e-5, rtol=1e-5), "two-phase path mismatch vs reference"

    # 3) non-128-aligned spatial extent (7x7 = 49): no pad/slice round trips, masked stores only.
    x7 = jax.random.normal(kx, (B, C, 7, 7), dtype=jnp.float32)
    ref7 = _reference(x7, w1, b1, w2, b2)
    out7 = jax.block_until_ready(channel_attention(x7, w1, b1, w2, b2))
    assert jnp.allclose(out7, ref7, atol=1e-5, rtol=1e-5), "fused 7x7 mismatch vs reference"
    out7_tp = jax.block_until_ready(channel_attention(x7, w1, b1, w2, b2, force_two_phase=True))
    assert jnp.allclose(out7_tp, ref7, atol=1e-5, rtol=1e-5), "two-phase 7x7 mismatch vs reference"

    # 4) native bf16 I/O (f32 mean/MLP, bf16-native final multiply), looser tolerance.
    x_bf = x.astype(jnp.bfloat16)
    out_bf = jax.block_until_ready(channel_attention(x_bf, w1, b1, w2, b2))
    assert out_bf.dtype == jnp.bfloat16
    ref_bf = _reference(x_bf.astype(jnp.float32), w1, b1, w2, b2)
    assert jnp.allclose(out_bf.astype(jnp.float32), ref_bf, atol=3e-2, rtol=3e-2), "bf16 path mismatch"

    print("KERNEL_OK")
</pallas_src>

<mosaic_0001>
module attributes {stable_mosaic.version = 11 : i64} {
  func.func @_fused_kernel(%arg0: i32, %arg1: memref<2x4x256xf32, #tpu.memory_space<vmem>>, %arg2: memref<4x4xf32, #tpu.memory_space<vmem>>, %arg3: memref<1x4xf32, #tpu.memory_space<vmem>>, %arg4: memref<4x4xf32, #tpu.memory_space<vmem>>, %arg5: memref<1x4xf32, #tpu.memory_space<vmem>>, %arg6: memref<2x4x256xf32, #tpu.memory_space<vmem>>) attributes {dimension_semantics = [#tpu.dimension_semantics<parallel>], iteration_bounds = array<i64: 1>, scalar_prefetch = 0 : i64, scratch_operands = 0 : i64, tpu.core_type = #tpu.core_type<tc>, window_params = [{transform_indices = @transform_0, window_bounds = array<i64: 2, 4, 256>}, {pipeline_mode = #tpu.pipeline_mode<synchronous>, transform_indices = @transform_1, window_bounds = array<i64: 4, 4>}, {pipeline_mode = #tpu.pipeline_mode<synchronous>, transform_indices = @transform_2, window_bounds = array<i64: 1, 4>}, {pipeline_mode = #tpu.pipeline_mode<synchronous>, transform_indices = @transform_3, window_bounds = array<i64: 4, 4>}, {pipeline_mode = #tpu.pipeline_mode<synchronous>, transform_indices = @transform_4, window_bounds = array<i64: 1, 4>}, {transform_indices = @transform_5, window_bounds = array<i64: 2, 4, 256>}]} {
    %c0 = arith.constant 0 : index
    %c0_0 = arith.constant 0 : index
    %c0_1 = arith.constant 0 : index
    %0 = vector.load %arg1[%c0, %c0_0, %c0_1] : memref<2x4x256xf32, #tpu.memory_space<vmem>>, vector<2x4x256xf32>
    %cst = arith.constant dense<0.000000e+00> : vector<2x4xf32>
    %1 = vector.multi_reduction <add>, %0, %cst [2] : vector<2x4x256xf32> to vector<2x4xf32>
    %cst_2 = arith.constant 3.906250e-03 : f32
    %2 = vector.broadcast %cst_2 : f32 to vector<2x4xf32>
    %3 = arith.mulf %1, %2 : vector<2x4xf32>
    %c0_3 = arith.constant 0 : index
    %c0_4 = arith.constant 0 : index
    %4 = vector.load %arg2[%c0_3, %c0_4] : memref<4x4xf32, #tpu.memory_space<vmem>>, vector<4x4xf32>
    %cst_5 = arith.constant dense<0.000000e+00> : vector<2x4xf32>
    %5 = tpu.matmul %3, %4, %cst_5 {dimension_numbers = #tpu.dot_dimension_numbers<[1], [0], [0], [1], [0, 0, 1, 1], [], []>} : vector<2x4xf32>, vector<4x4xf32>, vector<2x4xf32> -> vector<2x4xf32>
    %c0_6 = arith.constant 0 : index
    %c0_7 = arith.constant 0 : index
    %6 = vector.load %arg3[%c0_6, %c0_7] : memref<1x4xf32, #tpu.memory_space<vmem>>, vector<1x4xf32>
    %7 = vector.broadcast %6 : vector<1x4xf32> to vector<2x4xf32>
    %8 = arith.addf %5, %7 : vector<2x4xf32>
    %cst_8 = arith.constant 0.000000e+00 : f32
    %9 = vector.broadcast %cst_8 : f32 to vector<2x4xf32>
    %10 = arith.maximumf %8, %9 : vector<2x4xf32>
    %c0_9 = arith.constant 0 : index
    %c0_10 = arith.constant 0 : index
    %11 = vector.load %arg4[%c0_9, %c0_10] : memref<4x4xf32, #tpu.memory_space<vmem>>, vector<4x4xf32>
    %cst_11 = arith.constant dense<0.000000e+00> : vector<2x4xf32>
    %12 = tpu.matmul %10, %11, %cst_11 {dimension_numbers = #tpu.dot_dimension_numbers<[1], [0], [0], [1], [0, 0, 1, 1], [], []>} : vector<2x4xf32>, vector<4x4xf32>, vector<2x4xf32> -> vector<2x4xf32>
    %c0_12 = arith.constant 0 : index
    %c0_13 = arith.constant 0 : index
    %13 = vector.load %arg5[%c0_12, %c0_13] : memref<1x4xf32, #tpu.memory_space<vmem>>, vector<1x4xf32>
    %14 = vector.broadcast %13 : vector<1x4xf32> to vector<2x4xf32>
    %15 = arith.addf %12, %14 : vector<2x4xf32>
    %16 = arith.negf %15 : vector<2x4xf32>
    %17 = math.exp %16 : vector<2x4xf32>
    %cst_14 = arith.constant 1.000000e+00 : f32
    %18 = vector.broadcast %cst_14 : f32 to vector<2x4xf32>
    %19 = arith.addf %18, %17 : vector<2x4xf32>
    %20 = arith.divf %18, %19 : vector<2x4xf32>
    %c0_15 = arith.constant 0 : index
    %c0_16 = arith.constant 0 : index
    %c0_17 = arith.constant 0 : index
    %21 = vector.load %arg1[%c0_15, %c0_16, %c0_17] : memref<2x4x256xf32, #tpu.memory_space<vmem>>, vector<2x4x256xf32>
    %22 = vector.shape_cast %20 : vector<2x4xf32> to vector<2x4x1xf32>
    %23 = vector.broadcast %22 : vector<2x4x1xf32> to vector<2x4x256xf32>
    %24 = arith.mulf %21, %23 : vector<2x4x256xf32>
    %c0_18 = arith.constant 0 : index
    %c0_19 = arith.constant 0 : index
    %c0_20 = arith.constant 0 : index
    %25 = vector.load %arg6[%c0_18, %c0_19, %c0_20] : memref<2x4x256xf32, #tpu.memory_space<vmem>>, vector<2x4x256xf32>
    tpu.vector_store %arg6[%c0_18, %c0_19, %c0_20], %24 {strides = array<i32>} : memref<2x4x256xf32, #tpu.memory_space<vmem>>, vector<2x4x256xf32>,
    return
  }
  func.func @transform_0(%arg0: i32) -> (i32, i32, i32) {
    %c0_i32 = arith.constant 0 : i32
    %c0_i32_0 = arith.constant 0 : i32
    %c0_i32_1 = arith.constant 0 : i32
    return %arg0, %c0_i32, %c0_i32_0 : i32, i32, i32
  }
  func.func @transform_1(%arg0: i32) -> (i32, i32) {
    %c0_i32 = arith.constant 0 : i32
    %c0_i32_0 = arith.constant 0 : i32
    %c0_i32_1 = arith.constant 0 : i32
    return %c0_i32, %c0_i32_0 : i32, i32
  }
  func.func @transform_2(%arg0: i32) -> (i32, i32) {
    %c0_i32 = arith.constant 0 : i32
    %c0_i32_0 = arith.constant 0 : i32
    %c0_i32_1 = arith.constant 0 : i32
    return %c0_i32, %c0_i32_0 : i32, i32
  }
  func.func @transform_3(%arg0: i32) -> (i32, i32) {
    %c0_i32 = arith.constant 0 : i32
    %c0_i32_0 = arith.constant 0 : i32
    %c0_i32_1 = arith.constant 0 : i32
    return %c0_i32, %c0_i32_0 : i32, i32
  }
  func.func @transform_4(%arg0: i32) -> (i32, i32) {
    %c0_i32 = arith.constant 0 : i32
    %c0_i32_0 = arith.constant 0 : i32
    %c0_i32_1 = arith.constant 0 : i32
    return %c0_i32, %c0_i32_0 : i32, i32
  }
  func.func @transform_5(%arg0: i32) -> (i32, i32, i32) {
    %c0_i32 = arith.constant 0 : i32
    %c0_i32_0 = arith.constant 0 : i32
    %c0_i32_1 = arith.constant 0 : i32
    return %arg0, %c0_i32, %c0_i32_0 : i32, i32, i32
  }
}

</mosaic_0001>

<llo_original>
// kernel: tpu_custom_call.1
$region0: #{tpu_custom_call.1}
  #allocation0 [shape = 'u32[]', space=smem, size = 0x4, offset = 0x4, fixed_abs, tag = 'smem constant byte address 0x4 - core index']
  #allocation1 [shape = 'u32[72,128]{1,0:T(1,128)}', space=vmem, size = 0x9000, scoped, tag = 'internal scratch']
  %s0 = inlined_call_operand.hbm [shape: f32[2,4,256], index: 0, kind: input, shape index: {}]
  %s1 = inlined_call_operand.hbm [shape: f32[4,4], index: 1, kind: input, shape index: {}]
  %s2 = inlined_call_operand.vmem [shape: f32[1,4], index: 2, kind: input, shape index: {}]
  %s3 = inlined_call_operand.hbm [shape: f32[4,4], index: 3, kind: input, shape index: {}]
  %s4 = inlined_call_operand.vmem [shape: f32[1,4], index: 4, kind: input, shape index: {}]
  %s5 = inlined_call_operand.hbm [shape: f32[2,4,256], index: 5, kind: output, shape index: {}]
  %s6 = sld [smem:[#allocation0]]
  $region42: #{tpu_custom_call.1} parent=0
    _
  %s8 = ssub.s32 1, %s6
  %s9 = scalar_select 0, %s8, %s6
  $region1: #{tpu_custom_call.1} parent=0
    #allocation2 [shape = 'u8[8192]{0}', space=vmem, size = 0x2000, scoped, tag = 'input window, operand 0, single buffered']
    #allocation3 [shape = 's32[1]{0}', space=sflag, size = 0x4, scoped, tag = 'scoped memory for tpu_custom_call.1']
    #allocation4 [shape = 's32[1]{0}', space=sflag, size = 0x4, scoped, tag = 'scoped memory for tpu_custom_call.1']
    #allocation5 [shape = 'u8[2048]{0}', space=vmem, size = 0x800, scoped, tag = 'input window, operand 1, single buffered']
    #allocation6 [shape = 's32[1]{0}', space=sflag, size = 0x4, scoped, tag = 'scoped memory for tpu_custom_call.1']
    #allocation7 [shape = 'u8[2048]{0}', space=vmem, size = 0x800, scoped, tag = 'input window, operand 3, single buffered']
    #allocation8 [shape = 'u8[8192]{0}', space=vmem, size = 0x2000, scoped, tag = 'output window, operand 0, single buffered']
    %10 = vsyncpa [#allocation3], 0
    %11 = vsyncpa [#allocation6], 0
    %12 = vsyncpa [#allocation4], 0
    // Predicated region
    $region2: #{tpu_custom_call.1} parent=1 // pred_check
      _
    $region3: #{tpu_custom_call.1} parent=1 // pred_check_branch
      %14 = sbr.rel (0) target = $region5
    $region4: #{tpu_custom_call.1} parent=1 // pred_region
      %16 = vsyncadd [#allocation3], 0
      %s17 = sshll.u32 %s0, 4
      %s18 = int_to_ptr.hbm [resolvable:$true] %s17
      %s19 = sshll.u32 [#allocation2], 4
      %s20 = int_to_ptr.vmem [resolvable:$true] %s19
      %25 = dma.hbm_to_vmem [thread:$0]  %s18, 256, %s20, [#allocation3], 128, 128, 8
    $region5: #{tpu_custom_call.1} parent=1 // pred_fallthru
      _
    // Predicated region
    $region6: #{tpu_custom_call.1} parent=1 // pred_check
      _
    $region7: #{tpu_custom_call.1} parent=1 // pred_check_branch
      %27 = sbr.rel (0) target = $region9
    $region8: #{tpu_custom_call.1} parent=1 // pred_region
      %29 = vsyncadd [#allocation6], 0
      %s31 = sshll.u32 %s1, 4
      %s32 = int_to_ptr.hbm [resolvable:$true] %s31
      %s33 = sshll.u32 [#allocation5], 4
      %s34 = int_to_ptr.vmem [resolvable:$true] %s33
      %36 = dma.hbm_to_vmem [thread:$0]  %s32, 64, %s34, [#allocation6]
    $region9: #{tpu_custom_call.1} parent=1 // pred_fallthru
      _
    // Predicated region
    $region10: #{tpu_custom_call.1} parent=1 // pred_check
      _
    $region11: #{tpu_custom_call.1} parent=1 // pred_check_branch
      %38 = sbr.rel (0) target = $region13
    $region12: #{tpu_custom_call.1} parent=1 // pred_region
      _
    $region13: #{tpu_custom_call.1} parent=1 // pred_fallthru
      _
    // Predicated region
    $region14: #{tpu_custom_call.1} parent=1 // pred_check
      _
    $region15: #{tpu_custom_call.1} parent=1 // pred_check_branch
      %40 = sbr.rel (0) target = $region17
    $region16: #{tpu_custom_call.1} parent=1 // pred_region
      %42 = vsyncadd [#allocation6], 0
      %s44 = sshll.u32 %s3, 4
      %s45 = int_to_ptr.hbm [resolvable:$true] %s44
      %s46 = sshll.u32 [#allocation7], 4
      %s47 = int_to_ptr.vmem [resolvable:$true] %s46
      %49 = dma.hbm_to_vmem [thread:$0]  %s45, 64, %s47, [#allocation6]
    $region17: #{tpu_custom_call.1} parent=1 // pred_fallthru
      _
    // Predicated region
    $region18: #{tpu_custom_call.1} parent=1 // pred_check
      _
    $region19: #{tpu_custom_call.1} parent=1 // pred_check_branch
      %51 = sbr.rel (0) target = $region21
    $region20: #{tpu_custom_call.1} parent=1 // pred_region
      _
    $region21: #{tpu_custom_call.1} parent=1 // pred_fallthru
      _
    // Predicated region
    $region22: #{tpu_custom_call.1} parent=1 // pred_check
      _
    $region23: #{tpu_custom_call.1} parent=1 // pred_check_branch
      %53 = sbr.rel (0) target = $region25
    $region24: #{tpu_custom_call.1} parent=1 // pred_region
      %55 = dma.done [#allocation3], 256
    $region25: #{tpu_custom_call.1} parent=1 // pred_fallthru
      _
    // Predicated region
    $region26: #{tpu_custom_call.1} parent=1 // pred_check
      _
    $region27: #{tpu_custom_call.1} parent=1 // pred_check_branch
      %57 = sbr.rel (0) target = $region29
    $region28: #{tpu_custom_call.1} parent=1 // pred_region
      %59 = dma.done [#allocation6], 64
    $region29: #{tpu_custom_call.1} parent=1 // pred_fallthru
      _
    // Predicated region
    $region30: #{tpu_custom_call.1} parent=1 // pred_check
      _
    $region31: #{tpu_custom_call.1} parent=1 // pred_check_branch
      %61 = sbr.rel (0) target = $region33
    $region32: #{tpu_custom_call.1} parent=1 // pred_region
      %63 = dma.done [#allocation6], 64
    $region33: #{tpu_custom_call.1} parent=1 // pred_fallthru
      _
    %v64 = vld [vmem:[#allocation2] sm:$0xff]
    %v65 = vld [vmem:[#allocation2 + $0x8] sm:$0xff]
    %68 = vst [vmem:[#allocation1] ss:$2 sm:$0xff] %v64
    %v69 = vld.sshfl [vmem:[#allocation1] sm:$0xff pattern:$0x75316420]
    %v70 = vld.sshfl [vmem:[#allocation1 + $0x8] sm:$0xff pattern:$0x75316420]
    %s71 = scalar_lea.vmem [#allocation1], 16
    %72 = vst [vmem:[%s71] ss:$2 sm:$0xff] %v65
    %v73 = vld.sshfl [vmem:[#allocation1 + $0x10] sm:$0xff pattern:$0x75316420]
    %v74 = vld.sshfl [vmem:[#allocation1 + $0x18] sm:$0xff pattern:$0x75316420]
    %vm79 = vcmask 1043456
    %v80 = vsel %vm79, %v69, 0.0
    %v81 = vsel %vm79, %v70, 0.0
    %v82 = vadd.f32 %v80, %v81
    %83 = vadd.xlane.f32.xlu0 %v82
    %v84 = vpop.xlane.xlu0 %83
    %v85 = vsel %vm79, %v73, 0.0
    %v86 = vsel %vm79, %v74, 0.0
    %v87 = vadd.f32 %v85, %v86
    %88 = vadd.xlane.f32.xlu0 %v87
    %v89 = vpop.xlane.xlu0 %88
    %v90 = vmul.f32 %v84, 0.00390625
    %v91 = vmul.f32 %v89, 0.00390625
    %v92 = vld [vmem:[#allocation5] sm:$0xf]
    %v93 = vld [vmem:[%s2] sm:$0x1]
    %v95 = vperm.slane %v93, 0
    %v99 = vlaneseq
    %v100 = vand.u32 %v99, 127
    %v101 = vperm.slane %v90, %v100
    %v102 = vperm.slane %v91, %v100
    %vm103 = vcmask 1041409
    %v104 = vsel %vm103, %v102, %v101
    %vm105 = vcmask 31744
    %v106 = vsel %vm105, %v104, 0
    %v109 = vsel %vm79, %v92, 0
    %111 = vmatpush.msra.mxu0 0.0
    %112 = vmatpush.msra.mxu0 0.0
    %113 = vmatpush.msra.mxu0 0.0
    %114 = vmatpush.msra.mxu0 0.0
    %115 = vmatpush.msra.mxu0 0.0
    %116 = vmatpush.msra.mxu0 0.0
    %117 = vmatpush.msra.mxu0 0.0
    %118 = vmatpush.msra.mxu0 0.0
    %119 = vmatpush.msra.mxu0 0.0
    %120 = vmatpush.msra.mxu0 0.0
    %121 = vmatpush.msra.mxu0 0.0
    %122 = vmatpush.msra.mxu0 0.0
    %123 = vmatpush.msra.mxu0 0.0
    %124 = vmatpush.msra.mxu0 0.0
    %125 = vmatpush.msra.mxu0 0.0
    %126 = vmatpush.msra.mxu0 %v109
    %127 = vmatmul.f32.gmra.mxu0 %v106
    %v128 = vpop.f32.mrf.mxu0
    %v129 = vadd.f32 %v95, %v128
    %130 = vdwg.mxu0
    %v131 = vmax.f32 %v129, 0.0
    %v132 = vld [vmem:[#allocation7] sm:$0xf]
    %v133 = vld [vmem:[%s4] sm:$0x1]
    %v135 = vperm.slane %v133, 0
    %v138 = vsel %vm105, %v131, 0
    %v141 = vsel %vm79, %v132, 0
    %143 = vmatpush.msra.mxu0 0.0
    %144 = vmatpush.msra.mxu0 0.0
    %145 = vmatpush.msra.mxu0 0.0
    %146 = vmatpush.msra.mxu0 0.0
    %147 = vmatpush.msra.mxu0 0.0
    %148 = vmatpush.msra.mxu0 0.0
    %149 = vmatpush.msra.mxu0 0.0
    %150 = vmatpush.msra.mxu0 0.0
    %151 = vmatpush.msra.mxu0 0.0
    %152 = vmatpush.msra.mxu0 0.0
    %153 = vmatpush.msra.mxu0 0.0
    %154 = vmatpush.msra.mxu0 0.0
    %155 = vmatpush.msra.mxu0 0.0
    %156 = vmatpush.msra.mxu0 0.0
    %157 = vmatpush.msra.mxu0 0.0
    %158 = vmatpush.msra.mxu0 %v141
    %159 = vmatmul.f32.gmra.mxu0 %v138
    %v160 = vpop.f32.mrf.mxu0
    %v161 = vadd.f32 %v135, %v160
    %162 = vdwg.mxu0
    %v163 = vxor.u32 %v161, 2147483648
    %v164 = vmul.f32 %v163, 1.442695
    %v165 = vpow.pop %v164
    %v166 = vadd.f32 %v165, 1.0
    %v167 = vrcp.pop %v166
    %v168 = vmul.f32 %v166, %v167
    %v169 = vsub.f32 1.0, %v168
    %v170 = vmul.f32 %v167, %v169
    %v171 = vadd.f32 %v167, %v170
    %vm172 = vweird.f32 %v166
    %vm173 = vweird.f32 %v167
    %vm174 = vmor %vm172, %vm173
    %v175 = vsel %vm174, %v167, %v171
    %v176 = vand.u32 2147483647, %v166
    %vm177 = vcmp.eq.f32.partialorder %v176, 8.507059e+37
    %v178 = vand.u32 %v166, 2147483648
    %v179 = vor.u32 1.1754944e-38, %v178
    %v180 = vsel %vm177, %v179, %v175
    %v181 = vmul.f32 1.0, %v180
    %v182 = vperm.slane %v181, 0
    %v183 = vlaneseq
    %v184 = vshrl.u32 %v183, 7
    %186 = vset.pattern.permute.xlu0 %v184
    %187 = vperm.xlu0 %186, %v182
    %v188 = vpop.permute.xlu0 %187
    %v189 = vperm.slane %v181, 1
    %v190 = vlaneseq
    %v191 = vshrl.u32 %v190, 7
    %193 = vset.pattern.permute.xlu0 %v191
    %194 = vperm.xlu0 %193, %v189
    %v195 = vpop.permute.xlu0 %194
    %v199 = vunpack.c.l.s4 839922192
    %v200 = vunpack.c.0.s8 %v199
    %v201 = vperm.slane %v188, %v200
    %v203 = vunpack.c.l.s4 839922192
    %v204 = vunpack.c.0.s8 %v203
    %v205 = vperm.slane %v195, %v204
    %v208 = vmul.f32 %v64, %v201
    %v209 = vmul.f32 %v65, %v205
    %210 = vst [vmem:[#allocation8] sm:$0xff] %v208
    %211 = vst [vmem:[#allocation8 + $0x8] sm:$0xff] %v209
    // Predicated region
    $region34: #{tpu_custom_call.1} parent=1 // pred_check
      _
    $region35: #{tpu_custom_call.1} parent=1 // pred_check_branch
      %213 = sbr.rel (0) target = $region37
    $region36: #{tpu_custom_call.1} parent=1 // pred_region
      %215 = vsyncadd [#allocation4], 0
      %s216 = sshll.u32 [#allocation8], 4
      %s217 = int_to_ptr.vmem [resolvable:$true] %s216
      %s218 = sshll.u32 %s5, 4
      %s219 = int_to_ptr.hbm [resolvable:$true] %s218
      %224 = dma.vmem_to_hbm [thread:$0]  %s217, 256, %s219, [#allocation4], 128, 128, 8
    $region37: #{tpu_custom_call.1} parent=1 // pred_fallthru
      _
    // Predicated region
    $region38: #{tpu_custom_call.1} parent=1 // pred_check
      _
    $region39: #{tpu_custom_call.1} parent=1 // pred_check_branch
      %226 = sbr.rel (0) target = $region41
    $region40: #{tpu_custom_call.1} parent=1 // pred_region
      %228 = dma.done [#allocation4], 256
    $region41: #{tpu_custom_call.1} parent=1 // pred_fallthru
      _
    %229 = vsyncpa [#allocation3], 1
    %230 = vsyncpa [#allocation6], 1
    %231 = vsyncpa [#allocation4], 1

</llo_original>
